<compile_context>
chip_gen: v7x
topology: tpu7x:2x2x1
jax: 0.10.0
libtpu: 0.0.40
codegen_flags: <defaults>
</compile_context>

<pallas_src>
import functools

import jax
import jax.numpy as jnp
from jax.experimental import pallas as pl
from jax.experimental.pallas import tpu as pltpu


def _istft_kernel(spec_ref, ang_ref, nyq_ref, w_ref, nyqrow_ref, inv_wsum_ref,
                  out_ref, *, tb, frames, hop, n_fft):
    # spec/ang: (tb*frames, n_mid) f32, frequency bins 0..n_mid-1 on lanes.
    spec = spec_ref[...]
    ang = ang_ref[...]

    # complex spectrum = spec * exp(i*ang).  EUP transcendentals stay f32
    # (v5e EUP has no bf16; keeps phase accuracy within the 5e-3 budget).
    # TODO(synk): on v6e/v7x at small n_fft the EUP cos/sin can become the
    # binding slot; a bf16 EUP path is possible if the tolerance allows.
    xr = spec * jnp.cos(ang)
    xi = spec * jnp.sin(ang)

    # Fused inverse-rDFT matmul: real/imag halves concatenated along the
    # contraction axis (K = 2*n_mid = n_fft, an exact MXU tile) against the
    # stacked bf16 matrix [cw; sw] (window folded in).  bf16 cast happens
    # *before* the concat to halve the bytes/vregs feeding the MXU; the
    # accumulation stays f32.
    x_cat = jnp.concatenate(
        [xr.astype(jnp.bfloat16), xi.astype(jnp.bfloat16)], axis=-1)
    td = jnp.dot(x_cat, w_ref[...],
                 preferred_element_type=jnp.float32)       # (tb*frames, n_fft)

    # Nyquist bin k = n_fft/2 (irfft / Hermitian convention: DC and Nyquist
    # are purely real; DC's imaginary part is dropped via the zero sin row in
    # w, Nyquist's here).  sin(pi*t) == 0 exactly, so only xr_nyq contributes:
    # rank-1 f32 update on the VPU.
    td = td + nyq_ref[...] * nyqrow_ref[...]

    # Overlap-add: frame f starts at sample f*hop, n_fft = R*hop, i.e.
    # y[b, f + r, :] += td[b*frames + f, r*hop:(r+1)*hop].  Each output row
    # band is assembled once from its <= R contributing chunks (no zero-padded
    # partial slabs, single store of the output tile).
    R = n_fft // hop
    n_rows = frames + R - 1
    chunks = [td[:, r * hop:(r + 1) * hop].reshape(tb, frames, hop)
              for r in range(R)]

    if frames >= R:
        # middle rows j = R-1 .. frames-1: all R chunks contribute.
        mid = chunks[0][:, R - 1:frames]
        for r in range(1, R):
            mid = mid + chunks[r][:, R - 1 - r:frames - r]
        # head rows j = 0 .. R-2: chunks r = 0..j contribute.
        head = []
        for j in range(R - 1):
            row = chunks[0][:, j:j + 1]
            for r in range(1, j + 1):
                row = row + chunks[r][:, j - r:j - r + 1]
            head.append(row)
        # tail rows j = frames .. frames+R-2: chunks r = j-frames+1..R-1.
        tail = []
        for j in range(frames, n_rows):
            r0 = j - frames + 1
            row = chunks[r0][:, j - r0:j - r0 + 1]
            for r in range(r0 + 1, R):
                row = row + chunks[r][:, j - r:j - r + 1]
            tail.append(row)
        y = jnp.concatenate(head + [mid] + tail, axis=1)   # (tb, n_rows, hop)
    else:
        # fallback (frames < R): running accumulator over zero-padded slabs.
        zrow = jnp.zeros((tb, 1, hop), jnp.float32)
        y = None
        for r in range(R):
            part = jnp.concatenate(
                [zrow] * r + [chunks[r]] + [zrow] * (R - 1 - r), axis=1)
            y = part if y is None else y + part

    # Normalize by the precomputed reciprocal window envelope; single store.
    # TODO(synk): when hop < 128 this store is lane-masked ((n_rows, hop) tile
    # pads to a full lane tile); fold k = 128//hop rows into the lane dim for
    # a lane-dense store.  Moot at production hop_length >= 128.
    out_ref[...] = y * inv_wsum_ref[...][None]


def _num_tensorcores():
    """Best-effort TensorCore count (v7x: 2, v5e/v6e: 1)."""
    try:
        d = jax.devices()[0]
        for attr in ("num_cores", "core_count"):
            v = getattr(d, attr, None)
            if isinstance(v, int) and v > 0:
                return v
    except Exception:
        pass
    return 1


def _pick_tb(B, frames, target_m=512, num_cores=1, min_rows_per_step=128):
    """Largest divisor TB of B with TB*frames <= target_m (sublane-friendly or
    full block).  Single-TC chips (v5e/v6e) just take the biggest TB; only on
    multi-TC chips (v7x) keep a multi-step grid, and only when each step still
    feeds the MXU >= min_rows_per_step rows."""
    divs = [d for d in range(1, B + 1)
            if B % d == 0 and ((d * frames) % 8 == 0 or d == B)]
    fit = [d for d in divs if d * frames <= target_m] or [min(divs)]
    tb = max(fit)
    if num_cores > 1:
        split = [d for d in fit
                 if B // d >= num_cores and d * frames >= min_rows_per_step]
        if split:
            tb = max(split)
    return tb


def istft_pallas(spec, ang, window, n_fft, hop_length, center=True):
    sources, bsize, channels, fbins, frames = spec.shape
    assert fbins == n_fft // 2 + 1
    assert n_fft % hop_length == 0
    assert n_fft < 65536            # keeps the k*t phase math exact in int32
    R = n_fft // hop_length
    B = sources * bsize * channels
    n_mid = n_fft // 2
    n_rows = frames + R - 1
    out_full = n_rows * hop_length            # == hop*(frames-1) + n_fft

    # glue: (B, fbins, frames) -> (B*frames, n_mid) with freq on lanes, and the
    # Nyquist bin split off so the MXU contraction K = n_fft is 128-aligned and
    # the spec/ang rows need no 129-bin lane padding.
    # TODO(synk): this transpose is an extra HBM round trip of spec/ang; at
    # production sizes fuse it into the producer of spec/ang (or, when
    # frames >= 128, read the natural layout and transpose the VMEM tile on
    # the otherwise-idle XLU).
    spec_t = (spec.reshape(B, fbins, frames).transpose(0, 2, 1)
              .astype(jnp.float32))                        # (B, frames, fbins)
    ang_t = (ang.reshape(B, fbins, frames).transpose(0, 2, 1)
             .astype(jnp.float32))
    spec_f = spec_t[..., :n_mid].reshape(B * frames, n_mid)
    ang_f = ang_t[..., :n_mid].reshape(B * frames, n_mid)
    # Nyquist bin real part (its imaginary part contributes exactly zero).
    xr_nyq = (spec_t[..., n_mid] * jnp.cos(ang_t[..., n_mid])
              ).reshape(B * frames, 1)
    window = window.astype(jnp.float32)

    # Stacked onesided inverse-rDFT matrix for bins 0..n_mid-1 (bin 0 weighted
    # once, bins 1..n_mid-1 twice), 1/n_fft normalization, synthesis window
    # folded into the columns, bf16 for native-rate MXU.  Hermitian/irfft
    # convention: imaginary parts of DC (zero sin row) and Nyquist (handled as
    # a rank-1 update in the kernel) are dropped.
    kk = jnp.arange(n_mid, dtype=jnp.int32)[:, None]
    tt = jnp.arange(n_fft, dtype=jnp.int32)[None, :]
    phase = (2.0 * jnp.pi / n_fft) * ((kk * tt) % n_fft).astype(jnp.float32)
    w_k = jnp.where(kk == 0, 1.0, 2.0).astype(jnp.float32)
    cw = (w_k * jnp.cos(phase) / n_fft) * window[None, :]
    sw = (-w_k * jnp.sin(phase) / n_fft) * window[None, :]
    w_stacked = jnp.concatenate([cw, sw], axis=0).astype(jnp.bfloat16)

    # Nyquist-bin row (weight 1): cos(pi*t) = (-1)^t, window folded in.
    sign = jnp.where(jnp.arange(n_fft) % 2 == 0, 1.0, -1.0).astype(jnp.float32)
    nyq_row = (sign * window / n_fft).reshape(1, n_fft)

    # Reciprocal of the overlap-added squared-window envelope (istft denom).
    win_sq = window ** 2
    idx = (jnp.arange(frames)[:, None] * hop_length
           + jnp.arange(n_fft)[None, :]).reshape(-1)
    wsum = jnp.zeros((out_full,), jnp.float32).at[idx].add(
        jnp.tile(win_sq, frames))
    # TODO(synk): torch.istft raises on a degenerate (zero) window envelope; we
    # clamp the (trimmed-away) zero region instead of asserting NOLA.
    inv_wsum2d = jnp.where(wsum > 1e-11, 1.0 / wsum, 1.0).reshape(
        n_rows, hop_length)

    TB = _pick_tb(B, frames, target_m=512, num_cores=_num_tensorcores())
    M = TB * frames

    # Conservative VMEM budget (double-buffered I/O tiles + in-register temps),
    # clamped well below v7x's 64 MiB physical VMEM.
    io_bytes = (2 * M * n_mid * 4 + M * 4 + (2 * n_mid) * n_fft * 2
                + n_fft * 4 + n_rows * hop_length * 4
                + TB * n_rows * hop_length * 4)
    tmp_bytes = M * n_fft * 6 + 2 * TB * n_rows * hop_length * 4
    vmem_limit = int(min(48 << 20, max(16 << 20, 2 * (2 * io_bytes + tmp_bytes))))

    kernel = functools.partial(_istft_kernel, tb=TB, frames=frames,
                               hop=hop_length, n_fft=n_fft)
    # TODO(synk): at production n_fft (>=2048) single-buffer the grid-invariant
    # operands (w_stacked / nyq_row / inv_wsum2d, constant index_map) with
    # pipeline_mode=pl.Buffered(1), and for n_fft >= 4096 tile w_stacked along
    # its time axis as a second grid dim so the weight fits v7x's 64 MiB VMEM;
    # at these test sizes the weight is 128 KiB and default buffering is fine.
    out = pl.pallas_call(
        kernel,
        out_shape=jax.ShapeDtypeStruct((B, n_rows, hop_length), jnp.float32),
        grid_spec=pltpu.PrefetchScalarGridSpec(
            num_scalar_prefetch=0,
            grid=(B // TB,),
            in_specs=[
                pl.BlockSpec((M, n_mid), lambda i: (i, 0)),
                pl.BlockSpec((M, n_mid), lambda i: (i, 0)),
                pl.BlockSpec((M, 1), lambda i: (i, 0)),
                pl.BlockSpec((2 * n_mid, n_fft), lambda i: (0, 0)),
                pl.BlockSpec((1, n_fft), lambda i: (0, 0)),
                pl.BlockSpec((n_rows, hop_length), lambda i: (0, 0)),
            ],
            out_specs=pl.BlockSpec((TB, n_rows, hop_length),
                                   lambda i: (i, 0, 0)),
        ),
        compiler_params=pltpu.CompilerParams(
            dimension_semantics=("parallel",),
            vmem_limit_bytes=vmem_limit),
    )(spec_f, ang_f, xr_nyq, w_stacked, nyq_row, inv_wsum2d)

    wav = out.reshape(B, out_full)
    if center:                                             # trim center padding
        pad = n_fft // 2
        wav = wav[:, pad:out_full - pad]
    return wav.reshape(sources, bsize, channels, wav.shape[-1])


def istft_reference(spec, ang, window, n_fft, hop_length, center=True):
    """Pure-JAX reference (jnp.fft.irfft based) mirroring torch.istft."""
    sources, bsize, channels, fbins, frames = spec.shape
    B = sources * bsize * channels
    s = spec.reshape(B, fbins, frames).astype(jnp.float32)
    a = ang.reshape(B, fbins, frames).astype(jnp.float32)
    X = s * jnp.cos(a) + 1j * (s * jnp.sin(a))
    frames_td = jnp.fft.irfft(X, n=n_fft, axis=1)          # (B, n_fft, frames)
    frames_td = frames_td * window[None, :, None]
    out_full = hop_length * (frames - 1) + n_fft
    y = jnp.zeros((B, out_full), jnp.float32)
    wsum = jnp.zeros((out_full,), jnp.float32)
    win_sq = window ** 2
    for f in range(frames):
        y = y.at[:, f * hop_length:f * hop_length + n_fft].add(frames_td[:, :, f])
        wsum = wsum.at[f * hop_length:f * hop_length + n_fft].add(win_sq)
    wsum = jnp.where(wsum > 1e-11, wsum, 1.0)
    y = y / wsum[None, :]
    if center:
        pad = n_fft // 2
        y = y[:, pad:out_full - pad]
    return y.reshape(sources, bsize, channels, -1)


if __name__ == "__main__":
    # Small shapes consistent with the module (n_fft:hop ratio 4, onesided bins).
    n_fft, hop = 256, 64
    sources, bsize, channels = 2, 1, 2
    fbins = n_fft // 2 + 1
    frames = 8

    key = jax.random.PRNGKey(0)
    k1, k2 = jax.random.split(key)
    spec = jnp.abs(jax.random.normal(
        k1, (sources, bsize, channels, fbins, frames), jnp.float32))
    ang = jax.random.uniform(
        k2, (sources, bsize, channels, fbins, frames), jnp.float32,
        minval=-jnp.pi, maxval=jnp.pi)
    # deterministic "parameter": periodic Hann window (torch.hann_window default)
    window = 0.5 * (1.0 - jnp.cos(
        2.0 * jnp.pi * jnp.arange(n_fft, dtype=jnp.float32) / n_fft))

    wav = istft_pallas(spec, ang, window, n_fft, hop, center=True)
    wav = jax.block_until_ready(wav)

    assert wav.shape == (sources, bsize, channels, hop * (frames - 1)), wav.shape
    assert bool(jnp.all(jnp.isfinite(wav)))
    ref = istft_reference(spec, ang, window, n_fft, hop, center=True)
    assert bool(jnp.allclose(wav, ref, atol=5e-3, rtol=5e-3))
    print("KERNEL_OK")
</pallas_src>

<mosaic_0001>
module attributes {stable_mosaic.version = 11 : i64} {
  func.func @_istft_kernel(%arg0: i32, %arg1: memref<32x128xf32, #tpu.memory_space<vmem>>, %arg2: memref<32x128xf32, #tpu.memory_space<vmem>>, %arg3: memref<32x1xf32, #tpu.memory_space<vmem>>, %arg4: memref<256x256xbf16, #tpu.memory_space<vmem>>, %arg5: memref<1x256xf32, #tpu.memory_space<vmem>>, %arg6: memref<11x64xf32, #tpu.memory_space<vmem>>, %arg7: memref<4x11x64xf32, #tpu.memory_space<vmem>>) attributes {dimension_semantics = [#tpu.dimension_semantics<parallel>], iteration_bounds = array<i64: 1>, scalar_prefetch = 0 : i64, scratch_operands = 0 : i64, tpu.core_type = #tpu.core_type<tc>, window_params = [{transform_indices = @transform_0, window_bounds = array<i64: 32, 128>}, {transform_indices = @transform_1, window_bounds = array<i64: 32, 128>}, {transform_indices = @transform_2, window_bounds = array<i64: 32, 1>}, {pipeline_mode = #tpu.pipeline_mode<synchronous>, transform_indices = @transform_3, window_bounds = array<i64: 256, 256>}, {pipeline_mode = #tpu.pipeline_mode<synchronous>, transform_indices = @transform_4, window_bounds = array<i64: 1, 256>}, {pipeline_mode = #tpu.pipeline_mode<synchronous>, transform_indices = @transform_5, window_bounds = array<i64: 11, 64>}, {transform_indices = @transform_6, window_bounds = array<i64: 4, 11, 64>}]} {
    %c0 = arith.constant 0 : index
    %c0_0 = arith.constant 0 : index
    %0 = vector.load %arg1[%c0, %c0_0] : memref<32x128xf32, #tpu.memory_space<vmem>>, vector<32x128xf32>
    %c0_1 = arith.constant 0 : index
    %c0_2 = arith.constant 0 : index
    %1 = vector.load %arg2[%c0_1, %c0_2] : memref<32x128xf32, #tpu.memory_space<vmem>>, vector<32x128xf32>
    %2 = math.cos %1 : vector<32x128xf32>
    %3 = arith.mulf %0, %2 : vector<32x128xf32>
    %4 = math.sin %1 : vector<32x128xf32>
    %5 = arith.mulf %0, %4 : vector<32x128xf32>
    %6 = arith.truncf %3 : vector<32x128xf32> to vector<32x128xbf16>
    %7 = arith.truncf %5 : vector<32x128xf32> to vector<32x128xbf16>
    %8 = tpu.concatenate %6, %7 in 1 : vector<32x128xbf16>, vector<32x128xbf16> -> vector<32x256xbf16>
    %c0_3 = arith.constant 0 : index
    %c0_4 = arith.constant 0 : index
    %9 = vector.load %arg4[%c0_3, %c0_4] : memref<256x256xbf16, #tpu.memory_space<vmem>>, vector<256x256xbf16>
    %cst = arith.constant dense<0.000000e+00> : vector<32x256xf32>
    %10 = tpu.matmul %8, %9, %cst {dimension_numbers = #tpu.dot_dimension_numbers<[1], [0], [0], [1], [0, 0, 1, 1], [], []>} : vector<32x256xbf16>, vector<256x256xbf16>, vector<32x256xf32> -> vector<32x256xf32>
    %c0_5 = arith.constant 0 : index
    %c0_6 = arith.constant 0 : index
    %11 = vector.load %arg3[%c0_5, %c0_6] : memref<32x1xf32, #tpu.memory_space<vmem>>, vector<32x1xf32>
    %c0_7 = arith.constant 0 : index
    %c0_8 = arith.constant 0 : index
    %12 = vector.load %arg5[%c0_7, %c0_8] : memref<1x256xf32, #tpu.memory_space<vmem>>, vector<1x256xf32>
    %13 = vector.broadcast %11 : vector<32x1xf32> to vector<32x256xf32>
    %14 = vector.broadcast %12 : vector<1x256xf32> to vector<32x256xf32>
    %15 = arith.mulf %13, %14 : vector<32x256xf32>
    %16 = arith.addf %10, %15 : vector<32x256xf32>
    %17 = vector.extract_strided_slice %16 {offsets = [0, 0], sizes = [32, 64], strides = [1, 1]} : vector<32x256xf32> to vector<32x64xf32>
    %18 = vector.shape_cast %17 : vector<32x64xf32> to vector<4x8x64xf32>
    %19 = vector.extract_strided_slice %16 {offsets = [0, 64], sizes = [32, 64], strides = [1, 1]} : vector<32x256xf32> to vector<32x64xf32>
    %20 = vector.shape_cast %19 : vector<32x64xf32> to vector<4x8x64xf32>
    %21 = vector.extract_strided_slice %16 {offsets = [0, 128], sizes = [32, 64], strides = [1, 1]} : vector<32x256xf32> to vector<32x64xf32>
    %22 = vector.shape_cast %21 : vector<32x64xf32> to vector<4x8x64xf32>
    %23 = vector.extract_strided_slice %16 {offsets = [0, 192], sizes = [32, 64], strides = [1, 1]} : vector<32x256xf32> to vector<32x64xf32>
    %24 = vector.shape_cast %23 : vector<32x64xf32> to vector<4x8x64xf32>
    %25 = vector.extract_strided_slice %18 {offsets = [0, 3, 0], sizes = [4, 5, 64], strides = [1, 1, 1]} : vector<4x8x64xf32> to vector<4x5x64xf32>
    %26 = vector.extract_strided_slice %20 {offsets = [0, 2, 0], sizes = [4, 5, 64], strides = [1, 1, 1]} : vector<4x8x64xf32> to vector<4x5x64xf32>
    %27 = arith.addf %25, %26 : vector<4x5x64xf32>
    %28 = vector.extract_strided_slice %22 {offsets = [0, 1, 0], sizes = [4, 5, 64], strides = [1, 1, 1]} : vector<4x8x64xf32> to vector<4x5x64xf32>
    %29 = arith.addf %27, %28 : vector<4x5x64xf32>
    %30 = vector.extract_strided_slice %24 {offsets = [0, 0, 0], sizes = [4, 5, 64], strides = [1, 1, 1]} : vector<4x8x64xf32> to vector<4x5x64xf32>
    %31 = arith.addf %29, %30 : vector<4x5x64xf32>
    %32 = vector.extract_strided_slice %18 {offsets = [0, 0, 0], sizes = [4, 1, 64], strides = [1, 1, 1]} : vector<4x8x64xf32> to vector<4x1x64xf32>
    %33 = vector.extract_strided_slice %18 {offsets = [0, 1, 0], sizes = [4, 1, 64], strides = [1, 1, 1]} : vector<4x8x64xf32> to vector<4x1x64xf32>
    %34 = vector.extract_strided_slice %20 {offsets = [0, 0, 0], sizes = [4, 1, 64], strides = [1, 1, 1]} : vector<4x8x64xf32> to vector<4x1x64xf32>
    %35 = arith.addf %33, %34 : vector<4x1x64xf32>
    %36 = vector.extract_strided_slice %18 {offsets = [0, 2, 0], sizes = [4, 1, 64], strides = [1, 1, 1]} : vector<4x8x64xf32> to vector<4x1x64xf32>
    %37 = vector.extract_strided_slice %20 {offsets = [0, 1, 0], sizes = [4, 1, 64], strides = [1, 1, 1]} : vector<4x8x64xf32> to vector<4x1x64xf32>
    %38 = arith.addf %36, %37 : vector<4x1x64xf32>
    %39 = vector.extract_strided_slice %22 {offsets = [0, 0, 0], sizes = [4, 1, 64], strides = [1, 1, 1]} : vector<4x8x64xf32> to vector<4x1x64xf32>
    %40 = arith.addf %38, %39 : vector<4x1x64xf32>
    %41 = vector.extract_strided_slice %20 {offsets = [0, 7, 0], sizes = [4, 1, 64], strides = [1, 1, 1]} : vector<4x8x64xf32> to vector<4x1x64xf32>
    %42 = vector.extract_strided_slice %22 {offsets = [0, 6, 0], sizes = [4, 1, 64], strides = [1, 1, 1]} : vector<4x8x64xf32> to vector<4x1x64xf32>
    %43 = arith.addf %41, %42 : vector<4x1x64xf32>
    %44 = vector.extract_strided_slice %24 {offsets = [0, 5, 0], sizes = [4, 1, 64], strides = [1, 1, 1]} : vector<4x8x64xf32> to vector<4x1x64xf32>
    %45 = arith.addf %43, %44 : vector<4x1x64xf32>
    %46 = vector.extract_strided_slice %22 {offsets = [0, 7, 0], sizes = [4, 1, 64], strides = [1, 1, 1]} : vector<4x8x64xf32> to vector<4x1x64xf32>
    %47 = vector.extract_strided_slice %24 {offsets = [0, 6, 0], sizes = [4, 1, 64], strides = [1, 1, 1]} : vector<4x8x64xf32> to vector<4x1x64xf32>
    %48 = arith.addf %46, %47 : vector<4x1x64xf32>
    %49 = vector.extract_strided_slice %24 {offsets = [0, 7, 0], sizes = [4, 1, 64], strides = [1, 1, 1]} : vector<4x8x64xf32> to vector<4x1x64xf32>
    %50 = tpu.concatenate %32, %35, %40, %31, %45, %48, %49 in 1 : vector<4x1x64xf32>, vector<4x1x64xf32>, vector<4x1x64xf32>, vector<4x5x64xf32>, vector<4x1x64xf32>, vector<4x1x64xf32>, vector<4x1x64xf32> -> vector<4x11x64xf32>
    %c0_9 = arith.constant 0 : index
    %c0_10 = arith.constant 0 : index
    %51 = vector.load %arg6[%c0_9, %c0_10] : memref<11x64xf32, #tpu.memory_space<vmem>>, vector<11x64xf32>
    %52 = vector.shape_cast %51 : vector<11x64xf32> to vector<1x11x64xf32>
    %53 = vector.broadcast %52 : vector<1x11x64xf32> to vector<4x11x64xf32>
    %54 = arith.mulf %50, %53 : vector<4x11x64xf32>
    %c0_11 = arith.constant 0 : index
    %c0_12 = arith.constant 0 : index
    %c0_13 = arith.constant 0 : index
    %55 = vector.load %arg7[%c0_11, %c0_12, %c0_13] : memref<4x11x64xf32, #tpu.memory_space<vmem>>, vector<4x11x64xf32>
    tpu.vector_store %arg7[%c0_11, %c0_12, %c0_13], %54 {strides = array<i32>} : memref<4x11x64xf32, #tpu.memory_space<vmem>>, vector<4x11x64xf32>,
    return
  }
  func.func @transform_0(%arg0: i32) -> (i32, i32) {
    %c0_i32 = arith.constant 0 : i32
    %c0_i32_0 = arith.constant 0 : i32
    return %arg0, %c0_i32 : i32, i32
  }
  func.func @transform_1(%arg0: i32) -> (i32, i32) {
    %c0_i32 = arith.constant 0 : i32
    %c0_i32_0 = arith.constant 0 : i32
    return %arg0, %c0_i32 : i32, i32
  }
  func.func @transform_2(%arg0: i32) -> (i32, i32) {
    %c0_i32 = arith.constant 0 : i32
    %c0_i32_0 = arith.constant 0 : i32
    return %arg0, %c0_i32 : i32, i32
  }
  func.func @transform_3(%arg0: i32) -> (i32, i32) {
    %c0_i32 = arith.constant 0 : i32
    %c0_i32_0 = arith.constant 0 : i32
    %c0_i32_1 = arith.constant 0 : i32
    return %c0_i32, %c0_i32_0 : i32, i32
  }
  func.func @transform_4(%arg0: i32) -> (i32, i32) {
    %c0_i32 = arith.constant 0 : i32
    %c0_i32_0 = arith.constant 0 : i32
    %c0_i32_1 = arith.constant 0 : i32
    return %c0_i32, %c0_i32_0 : i32, i32
  }
  func.func @transform_5(%arg0: i32) -> (i32, i32) {
    %c0_i32 = arith.constant 0 : i32
    %c0_i32_0 = arith.constant 0 : i32
    %c0_i32_1 = arith.constant 0 : i32
    return %c0_i32, %c0_i32_0 : i32, i32
  }
  func.func @transform_6(%arg0: i32) -> (i32, i32, i32) {
    %c0_i32 = arith.constant 0 : i32
    %c0_i32_0 = arith.constant 0 : i32
    %c0_i32_1 = arith.constant 0 : i32
    return %arg0, %c0_i32, %c0_i32_0 : i32, i32, i32
  }
}

</mosaic_0001>

<llo_original>
// kernel: tpu_custom_call.1
$region0: #{tpu_custom_call.1}
  #allocation0 [shape = 'u32[]', space=smem, size = 0x4, offset = 0x4, fixed_abs, tag = 'smem constant byte address 0x4 - core index']
  #allocation1 [shape = 'u32[144,128]{1,0:T(1,128)}', space=vmem, size = 0x12000, scoped, tag = 'internal scratch']
  %s0 = inlined_call_operand.vmem [shape: f32[32,128], index: 0, kind: input, shape index: {}]
  %s1 = inlined_call_operand.hbm [shape: f32[32,128], index: 1, kind: input, shape index: {}]
  %s2 = inlined_call_operand.vmem [shape: f32[32,1], index: 2, kind: input, shape index: {}]
  %s3 = inlined_call_operand.hbm [shape: bf16[256,256], index: 3, kind: input, shape index: {}]
  %s4 = inlined_call_operand.hbm [shape: f32[1,256], index: 4, kind: input, shape index: {}]
  %s5 = inlined_call_operand.vmem [shape: f32[11,64], index: 5, kind: input, shape index: {}]
  %s6 = inlined_call_operand.vmem [shape: f32[4,11,64], index: 6, kind: output, shape index: {}]
  %s7 = sld [smem:[#allocation0]]
  $region46: #{tpu_custom_call.1} parent=0
    _
  %s9 = ssub.s32 1, %s7
  %s10 = scalar_select 0, %s9, %s7
  $region1: #{tpu_custom_call.1} parent=0
    #allocation2 [shape = 'u8[16384]{0}', space=vmem, size = 0x4000, scoped, tag = 'input window, operand 1, single buffered']
    #allocation3 [shape = 's32[1]{0}', space=sflag, size = 0x4, scoped, tag = 'scoped memory for tpu_custom_call.1']
    #allocation4 [shape = 'u8[131072]{0}', space=vmem, size = 0x20000, scoped, tag = 'input window, operand 3, single buffered']
    #allocation5 [shape = 's32[1]{0}', space=sflag, size = 0x4, scoped, tag = 'scoped memory for tpu_custom_call.1']
    #allocation6 [shape = 'u8[1024]{0}', space=vmem, size = 0x400, scoped, tag = 'input window, operand 4, single buffered']
    %11 = vsyncpa [#allocation3], 0
    %12 = vsyncpa [#allocation5], 0
    // Predicated region
    $region2: #{tpu_custom_call.1} parent=1 // pred_check
      _
    $region3: #{tpu_custom_call.1} parent=1 // pred_check_branch
      %14 = sbr.rel (0) target = $region5
    $region4: #{tpu_custom_call.1} parent=1 // pred_region
      _
    $region5: #{tpu_custom_call.1} parent=1 // pred_fallthru
      _
    // Predicated region
    $region6: #{tpu_custom_call.1} parent=1 // pred_check
      _
    $region7: #{tpu_custom_call.1} parent=1 // pred_check_branch
      %16 = sbr.rel (0) target = $region9
    $region8: #{tpu_custom_call.1} parent=1 // pred_region
      %s18 = ssub.s32 512, 512
      %19 = vsyncadd [#allocation3], %s18
      %s20 = sshll.u32 [#allocation2], 4
      %s21 = int_to_ptr.vmem [resolvable:$true] %s20
      %26 = dma.hbm_to_vmem [thread:$0]  %s1, 512, %s21, [#allocation3], 128, 128, 8
    $region9: #{tpu_custom_call.1} parent=1 // pred_fallthru
      _
    // Predicated region
    $region10: #{tpu_custom_call.1} parent=1 // pred_check
      _
    $region11: #{tpu_custom_call.1} parent=1 // pred_check_branch
      %28 = sbr.rel (0) target = $region13
    $region12: #{tpu_custom_call.1} parent=1 // pred_region
      _
    $region13: #{tpu_custom_call.1} parent=1 // pred_fallthru
      _
    // Predicated region
    $region14: #{tpu_custom_call.1} parent=1 // pred_check
      _
    $region15: #{tpu_custom_call.1} parent=1 // pred_check_branch
      %30 = sbr.rel (0) target = $region17
    $region16: #{tpu_custom_call.1} parent=1 // pred_region
      %s32 = ssub.s32 4096, 4096
      %33 = vsyncadd [#allocation5], %s32
      %s34 = sshll.u32 [#allocation4], 4
      %s35 = int_to_ptr.vmem [resolvable:$true] %s34
      %40 = dma.hbm_to_vmem [thread:$0]  %s3, 4096, %s35, [#allocation5], 128, 128, 8
    $region17: #{tpu_custom_call.1} parent=1 // pred_fallthru
      _
    // Predicated region
    $region18: #{tpu_custom_call.1} parent=1 // pred_check
      _
    $region19: #{tpu_custom_call.1} parent=1 // pred_check_branch
      %42 = sbr.rel (0) target = $region21
    $region20: #{tpu_custom_call.1} parent=1 // pred_region
      %s44 = ssub.s32 32, 32
      %45 = vsyncadd [#allocation5], %s44
      %s47 = sshll.u32 [#allocation6], 4
      %s48 = int_to_ptr.vmem [resolvable:$true] %s47
      %50 = dma.hbm_to_vmem [thread:$0]  %s4, 32, %s48, [#allocation5]
    $region21: #{tpu_custom_call.1} parent=1 // pred_fallthru
      _
    // Predicated region
    $region22: #{tpu_custom_call.1} parent=1 // pred_check
      _
    $region23: #{tpu_custom_call.1} parent=1 // pred_check_branch
      %52 = sbr.rel (0) target = $region25
    $region24: #{tpu_custom_call.1} parent=1 // pred_region
      _
    $region25: #{tpu_custom_call.1} parent=1 // pred_fallthru
      _
    // Predicated region
    $region26: #{tpu_custom_call.1} parent=1 // pred_check
      _
    $region27: #{tpu_custom_call.1} parent=1 // pred_check_branch
      %54 = sbr.rel (0) target = $region29
    $region28: #{tpu_custom_call.1} parent=1 // pred_region
      %55 = dma.done [#allocation3], 512
    $region29: #{tpu_custom_call.1} parent=1 // pred_fallthru
      _
    // Predicated region
    $region30: #{tpu_custom_call.1} parent=1 // pred_check
      _
    $region31: #{tpu_custom_call.1} parent=1 // pred_check_branch
      %57 = sbr.rel (0) target = $region33
    $region32: #{tpu_custom_call.1} parent=1 // pred_region
      %58 = dma.done [#allocation5], 4096
    $region33: #{tpu_custom_call.1} parent=1 // pred_fallthru
      _
    // Predicated region
    $region34: #{tpu_custom_call.1} parent=1 // pred_check
      _
    $region35: #{tpu_custom_call.1} parent=1 // pred_check_branch
      %60 = sbr.rel (0) target = $region37
    $region36: #{tpu_custom_call.1} parent=1 // pred_region
      %61 = dma.done [#allocation5], 32
    $region37: #{tpu_custom_call.1} parent=1 // pred_fallthru
      _
    %v62 = vld [vmem:[%s0] sm:$0xff]
    %v63 = vld [vmem:[%s0 + $0x8] sm:$0xff]
    %v64 = vld [vmem:[%s0 + $0x10] sm:$0xff]
    %v65 = vld [vmem:[%s0 + $0x18] sm:$0xff]
    %v66 = vld [vmem:[#allocation2] sm:$0xff]
    %v67 = vld [vmem:[#allocation2 + $0x8] sm:$0xff]
    %v68 = vld [vmem:[#allocation2 + $0x10] sm:$0xff]
    %v69 = vld [vmem:[#allocation2 + $0x18] sm:$0xff]
    %v70 = vand.u32 2147483647, %v66
    %vm71 = vcmp.le.f32.partialorder %v70, 0.7853982
    %vm72 = vcmp.lt.s32.totalorder %v66, 0
    %v73 = vand.u32 %v66, 2139095040
    %v74 = vshrl.u32 %v73, 23
    %v75 = vsub.s32 %v74, 127
    %v76 = vand.u32 2147483647, %v66
    %v77 = vand.u32 %v76, 8388607
    %v78 = vor.u32 %v77, 8388608
    %v79 = vsub.s32 0, %v78
    %v80 = vadd.s32 %v75, 1
    %vm81 = vcmp.gt.s32.totalorder %v80, 0
    %v82 = vsel %vm81, %v80, 0
    %v83 = vshrl.u32 %v82, 5
    %v84 = vand.u32 %v82, 31
    %v85 = vsub.s32 32, %v84
    %v86 = vshrl.u32 683565275, %v85
    %v87 = vshll.u32 683565275, %v84
    %v88 = vshrl.u32 2475754826, %v85
    %v89 = vor.u32 %v87, %v88
    %v90 = vshll.u32 2475754826, %v84
    %v91 = vshrl.u32 2131351028, %v85
    %v92 = vor.u32 %v90, %v91
    %v93 = vshll.u32 2131351028, %v84
    %v94 = vshrl.u32 2102212464, %v85
    %v95 = vor.u32 %v93, %v94
    %v96 = vshll.u32 2102212464, %v84
    %v97 = vshrl.u32 920167782, %v85
    %v98 = vor.u32 %v96, %v97
    %v99 = vshll.u32 920167782, %v84
    %v100 = vshrl.u32 1326507024, %v85
    %v101 = vor.u32 %v99, %v100
    %vm102 = vcmp.lt.s32.totalorder %v83, 1
    %vm103 = vcmp.lt.s32.totalorder %v83, 2
    %vm104 = vcmp.lt.s32.totalorder %v83, 3
    %vm105 = vcmp.lt.s32.totalorder %v83, 4
    %v106 = vsel %vm102, %v86, %v89
    %v107 = vsel %vm105, %v95, 2102212464
    %v108 = vsel %vm104, %v92, %v107
    %v109 = vsel %vm103, %v106, %v108
    %v110 = vsel %vm102, %v89, %v92
    %v111 = vsel %vm105, %v98, 920167782
    %v112 = vsel %vm104, %v95, %v111
    %v113 = vsel %vm103, %v110, %v112
    %v114 = vsel %vm102, %v92, %v95
    %v115 = vsel %vm105, %v101, 1326507024
    %v116 = vsel %vm104, %v98, %v115
    %v117 = vsel %vm103, %v114, %v116
    %v118 = vshll.u32 %v78, 8
    %v119 = vmul.u32.u64.compose %v118, %v117
    %v120 = vextract.low.u32 %v119
    %v121 = vextract.high.u32 %v119
    %v122 = vmul.u32.u64.compose %v118, %v113
    %v123 = vextract.low.u32 %v122
    %v124 = vextract.high.u32 %v122
    %v125 = vmul.u32 %v118, %v109
    %v126 = vadd.s32 %v121, %v123
    %vm127 = vc.u32 %v121, %v123
    %v128 = vadd.s32 %v124, 1
    %v129 = vsel %vm127, %v128, %v124
    %v130 = vadd.s32 %v125, %v129
    %v131 = vadd.s32 %v130, 536870912
    %v132 = vshrl.u32 %v131, 30
    %v133 = vshll.u32 %v132, 30
    %v134 = vsub.s32 %v130, %v133
    %vm135 = vcmp.lt.s32.totalorder %v134, 0
    %v136 = vsub.s32 0, %v134
    %v137 = vsel %vm135, %v136, %v134
    %v138 = vclz %v137
    %v139 = vsub.s32 %v138, 2
    %vm140 = vcmp.gt.s32.totalorder 0, %v139
    %v141 = vsel %vm140, 0, %v139
    %v142 = vsub.s32 32, %v141
    %v143 = vshll.u32 %v134, %v141
    %v144 = vshrl.u32 %v126, %v142
    %v145 = vor.u32 %v143, %v144
    %v146 = vsub.s32 4294967266, %v141
    %v147 = vadd.s32 %v146, 127
    %v148 = vshll.u32 %v147, 23
    %v149 = vor.u32 4788187, %v148
    %v150 = vand.u32 2147483647, %v149
    %v152 = vcvt.s32.f32 %v145
    %v153 = vmul.f32 %v152, %v150
    %v154 = vxor.u32 %v153, 2147483648
    %v155 = vsel %vm72, %v154, %v153
    %v156 = vsub.s32 4, %v132
    %v157 = vsel %vm72, %v156, %v132
    %v158 = vsel %vm71, %v66, %v155
    %v159 = vsel %vm71, 0, %v157
    %v160 = vcosq.f32.pop %v158
    %v161 = vsinq.f32.pop %v158
    %vm162 = vweird.f32 %v66
    %v163 = vand.u32 %v159, 3
    %vm164 = vcmp.lt.s32.totalorder %v163, 2
    %vm165 = vcmp.eq.s32.totalorder %v163, 0
    %v166 = vxor.u32 %v161, 2147483648
    %v167 = vsel %vm165, %v160, %v166
    %vm168 = vcmp.eq.s32.totalorder %v163, 2
    %v169 = vxor.u32 %v160, 2147483648
    %v170 = vsel %vm168, %v169, %v161
    %v171 = vsel %vm164, %v167, %v170
    %v172 = vsel %vm162, nan, %v171
    %v173 = vand.u32 2147483647, %v67
    %vm174 = vcmp.le.f32.partialorder %v173, 0.7853982
    %vm175 = vcmp.lt.s32.totalorder %v67, 0
    %v176 = vand.u32 %v67, 2139095040
    %v177 = vshrl.u32 %v176, 23
    %v178 = vsub.s32 %v177, 127
    %v179 = vand.u32 2147483647, %v67
    %v180 = vand.u32 %v179, 8388607
    %v181 = vor.u32 %v180, 8388608
    %v182 = vsub.s32 0, %v181
    %v183 = vadd.s32 %v178, 1
    %vm184 = vcmp.gt.s32.totalorder %v183, 0
    %v185 = vsel %vm184, %v183, 0
    %v186 = vshrl.u32 %v185, 5
    %v187 = vand.u32 %v185, 31
    %v188 = vsub.s32 32, %v187
    %v189 = vshrl.u32 683565275, %v188
    %v190 = vshll.u32 683565275, %v187
    %v191 = vshrl.u32 2475754826, %v188
    %v192 = vor.u32 %v190, %v191
    %v193 = vshll.u32 2475754826, %v187
    %v194 = vshrl.u32 2131351028, %v188
    %v195 = vor.u32 %v193, %v194
    %v196 = vshll.u32 2131351028, %v187
    %v197 = vshrl.u32 2102212464, %v188
    %v198 = vor.u32 %v196, %v197
    %v199 = vshll.u32 2102212464, %v187
    %v200 = vshrl.u32 920167782, %v188
    %v201 = vor.u32 %v199, %v200
    %v202 = vshll.u32 920167782, %v187
    %v203 = vshrl.u32 1326507024, %v188
    %v204 = vor.u32 %v202, %v203
    %vm205 = vcmp.lt.s32.totalorder %v186, 1
    %vm206 = vcmp.lt.s32.totalorder %v186, 2
    %vm207 = vcmp.lt.s32.totalorder %v186, 3
    %vm208 = vcmp.lt.s32.totalorder %v186, 4
    %v209 = vsel %vm205, %v189, %v192
    %v210 = vsel %vm208, %v198, 2102212464
    %v211 = vsel %vm207, %v195, %v210
    %v212 = vsel %vm206, %v209, %v211
    %v213 = vsel %vm205, %v192, %v195
    %v214 = vsel %vm208, %v201, 920167782
    %v215 = vsel %vm207, %v198, %v214
    %v216 = vsel %vm206, %v213, %v215
    %v217 = vsel %vm205, %v195, %v198
    %v218 = vsel %vm208, %v204, 1326507024
    %v219 = vsel %vm207, %v201, %v218
    %v220 = vsel %vm206, %v217, %v219
    %v221 = vshll.u32 %v181, 8
    %v222 = vmul.u32.u64.compose %v221, %v220
    %v223 = vextract.low.u32 %v222
    %v224 = vextract.high.u32 %v222
    %v225 = vmul.u32.u64.compose %v221, %v216
    %v226 = vextract.low.u32 %v225
    %v227 = vextract.high.u32 %v225
    %v228 = vmul.u32 %v221, %v212
    %v229 = vadd.s32 %v224, %v226
    %vm230 = vc.u32 %v224, %v226
    %v231 = vadd.s32 %v227, 1
    %v232 = vsel %vm230, %v231, %v227
    %v233 = vadd.s32 %v228, %v232
    %v234 = vadd.s32 %v233, 536870912
    %v235 = vshrl.u32 %v234, 30
    %v236 = vshll.u32 %v235, 30
    %v237 = vsub.s32 %v233, %v236
    %vm238 = vcmp.lt.s32.totalorder %v237, 0
    %v239 = vsub.s32 0, %v237
    %v240 = vsel %vm238, %v239, %v237
    %v241 = vclz %v240
    %v242 = vsub.s32 %v241, 2
    %vm243 = vcmp.gt.s32.totalorder 0, %v242
    %v244 = vsel %vm243, 0, %v242
    %v245 = vsub.s32 32, %v244
    %v246 = vshll.u32 %v237, %v244
    %v247 = vshrl.u32 %v229, %v245
    %v248 = vor.u32 %v246, %v247
    %v249 = vsub.s32 4294967266, %v244
    %v250 = vadd.s32 %v249, 127
    %v251 = vshll.u32 %v250, 23
    %v252 = vor.u32 4788187, %v251
    %v253 = vand.u32 2147483647, %v252
    %v255 = vcvt.s32.f32 %v248
    %v256 = vmul.f32 %v255, %v253
    %v257 = vxor.u32 %v256, 2147483648
    %v258 = vsel %vm175, %v257, %v256
    %v259 = vsub.s32 4, %v235
    %v260 = vsel %vm175, %v259, %v235
    %v261 = vsel %vm174, %v67, %v258
    %v262 = vsel %vm174, 0, %v260
    %v263 = vcosq.f32.pop %v261
    %v264 = vsinq.f32.pop %v261
    %vm265 = vweird.f32 %v67
    %v266 = vand.u32 %v262, 3
    %vm267 = vcmp.lt.s32.totalorder %v266, 2
    %vm268 = vcmp.eq.s32.totalorder %v266, 0
    %v269 = vxor.u32 %v264, 2147483648
    %v270 = vsel %vm268, %v263, %v269
    %vm271 = vcmp.eq.s32.totalorder %v266, 2
    %v272 = vxor.u32 %v263, 2147483648
    %v273 = vsel %vm271, %v272, %v264
    %v274 = vsel %vm267, %v270, %v273
    %v275 = vsel %vm265, nan, %v274
    %v276 = vand.u32 2147483647, %v68
    %vm277 = vcmp.le.f32.partialorder %v276, 0.7853982
    %vm278 = vcmp.lt.s32.totalorder %v68, 0
    %v279 = vand.u32 %v68, 2139095040
    %v280 = vshrl.u32 %v279, 23
    %v281 = vsub.s32 %v280, 127
    %v282 = vand.u32 2147483647, %v68
    %v283 = vand.u32 %v282, 8388607
    %v284 = vor.u32 %v283, 8388608
    %v285 = vsub.s32 0, %v284
    %v286 = vadd.s32 %v281, 1
    %vm287 = vcmp.gt.s32.totalorder %v286, 0
    %v288 = vsel %vm287, %v286, 0
    %v289 = vshrl.u32 %v288, 5
    %v290 = vand.u32 %v288, 31
    %v291 = vsub.s32 32, %v290
    %v292 = vshrl.u32 683565275, %v291
    %v293 = vshll.u32 683565275, %v290
    %v294 = vshrl.u32 2475754826, %v291
    %v295 = vor.u32 %v293, %v294
    %v296 = vshll.u32 2475754826, %v290
    %v297 = vshrl.u32 2131351028, %v291
    %v298 = vor.u32 %v296, %v297
    %v299 = vshll.u32 2131351028, %v290
    %v300 = vshrl.u32 2102212464, %v291
    %v301 = vor.u32 %v299, %v300
    %v302 = vshll.u32 2102212464, %v290
    %v303 = vshrl.u32 920167782, %v291
    %v304 = vor.u32 %v302, %v303
    %v305 = vshll.u32 920167782, %v290
    %v306 = vshrl.u32 1326507024, %v291
    %v307 = vor.u32 %v305, %v306
    %vm308 = vcmp.lt.s32.totalorder %v289, 1
    %vm309 = vcmp.lt.s32.totalorder %v289, 2
    %vm310 = vcmp.lt.s32.totalorder %v289, 3
    %vm311 = vcmp.lt.s32.totalorder %v289, 4
    %v312 = vsel %vm308, %v292, %v295
    %v313 = vsel %vm311, %v301, 2102212464
    %v314 = vsel %vm310, %v298, %v313
    %v315 = vsel %vm309, %v312, %v314
    %v316 = vsel %vm308, %v295, %v298
    %v317 = vsel %vm311, %v304, 920167782
    %v318 = vsel %vm310, %v301, %v317
    %v319 = vsel %vm309, %v316, %v318
    %v320 = vsel %vm308, %v298, %v301
    %v321 = vsel %vm311, %v307, 1326507024
    %v322 = vsel %vm310, %v304, %v321
    %v323 = vsel %vm309, %v320, %v322
    %v324 = vshll.u32 %v284, 8
    %v325 = vmul.u32.u64.compose %v324, %v323
    %v326 = vextract.low.u32 %v325
    %v327 = vextract.high.u32 %v325
    %v328 = vmul.u32.u64.compose %v324, %v319
    %v329 = vextract.low.u32 %v328
    %v330 = vextract.high.u32 %v328
    %v331 = vmul.u32 %v324, %v315
    %v332 = vadd.s32 %v327, %v329
    %vm333 = vc.u32 %v327, %v329
    %v334 = vadd.s32 %v330, 1
    %v335 = vsel %vm333, %v334, %v330
    %v336 = vadd.s32 %v331, %v335
    %v337 = vadd.s32 %v336, 536870912
    %v338 = vshrl.u32 %v337, 30
    %v339 = vshll.u32 %v338, 30
    %v340 = vsub.s32 %v336, %v339
    %vm341 = vcmp.lt.s32.totalorder %v340, 0
    %v342 = vsub.s32 0, %v340
    %v343 = vsel %vm341, %v342, %v340
    %v344 = vclz %v343
    %v345 = vsub.s32 %v344, 2
    %vm346 = vcmp.gt.s32.totalorder 0, %v345
    %v347 = vsel %vm346, 0, %v345
    %v348 = vsub.s32 32, %v347
    %v349 = vshll.u32 %v340, %v347
    %v350 = vshrl.u32 %v332, %v348
    %v351 = vor.u32 %v349, %v350
    %v352 = vsub.s32 4294967266, %v347
    %v353 = vadd.s32 %v352, 127
    %v354 = vshll.u32 %v353, 23
    %v355 = vor.u32 4788187, %v354
    %v356 = vand.u32 2147483647, %v355
    %v358 = vcvt.s32.f32 %v351
    %v359 = vmul.f32 %v358, %v356
    %v360 = vxor.u32 %v359, 2147483648
    %v361 = vsel %vm278, %v360, %v359
    %v362 = vsub.s32 4, %v338
    %v363 = vsel %vm278, %v362, %v338
    %v364 = vsel %vm277, %v68, %v361
    %v365 = vsel %vm277, 0, %v363
    %v366 = vcosq.f32.pop %v364
    %v367 = vsinq.f32.pop %v364
    %vm368 = vweird.f32 %v68
    %v369 = vand.u32 %v365, 3
    %vm370 = vcmp.lt.s32.totalorder %v369, 2
    %vm371 = vcmp.eq.s32.totalorder %v369, 0
    %v372 = vxor.u32 %v367, 2147483648
    %v373 = vsel %vm371, %v366, %v372
    %vm374 = vcmp.eq.s32.totalorder %v369, 2
    %v375 = vxor.u32 %v366, 2147483648
    %v376 = vsel %vm374, %v375, %v367
    %v377 = vsel %vm370, %v373, %v376
    %v378 = vsel %vm368, nan, %v377
    %v379 = vand.u32 2147483647, %v69
    %vm380 = vcmp.le.f32.partialorder %v379, 0.7853982
    %vm381 = vcmp.lt.s32.totalorder %v69, 0
    %v382 = vand.u32 %v69, 2139095040
    %v383 = vshrl.u32 %v382, 23
    %v384 = vsub.s32 %v383, 127
    %v385 = vand.u32 2147483647, %v69
    %v386 = vand.u32 %v385, 8388607
    %v387 = vor.u32 %v386, 8388608
    %v388 = vsub.s32 0, %v387
    %v389 = vadd.s32 %v384, 1
    %vm390 = vcmp.gt.s32.totalorder %v389, 0
    %v391 = vsel %vm390, %v389, 0
    %v392 = vshrl.u32 %v391, 5
    %v393 = vand.u32 %v391, 31
    %v394 = vsub.s32 32, %v393
    %v395 = vshrl.u32 683565275, %v394
    %v396 = vshll.u32 683565275, %v393
    %v397 = vshrl.u32 2475754826, %v394
    %v398 = vor.u32 %v396, %v397
    %v399 = vshll.u32 2475754826, %v393
    %v400 = vshrl.u32 2131351028, %v394
    %v401 = vor.u32 %v399, %v400
    %v402 = vshll.u32 2131351028, %v393
    %v403 = vshrl.u32 2102212464, %v394
    %v404 = vor.u32 %v402, %v403
    %v405 = vshll.u32 2102212464, %v393
    %v406 = vshrl.u32 920167782, %v394
    %v407 = vor.u32 %v405, %v406
    %v408 = vshll.u32 920167782, %v393
    %v409 = vshrl.u32 1326507024, %v394
    %v410 = vor.u32 %v408, %v409
    %vm411 = vcmp.lt.s32.totalorder %v392, 1
    %vm412 = vcmp.lt.s32.totalorder %v392, 2
    %vm413 = vcmp.lt.s32.totalorder %v392, 3
    %vm414 = vcmp.lt.s32.totalorder %v392, 4
    %v415 = vsel %vm411, %v395, %v398
    %v416 = vsel %vm414, %v404, 2102212464
    %v417 = vsel %vm413, %v401, %v416
    %v418 = vsel %vm412, %v415, %v417
    %v419 = vsel %vm411, %v398, %v401
    %v420 = vsel %vm414, %v407, 920167782
    %v421 = vsel %vm413, %v404, %v420
    %v422 = vsel %vm412, %v419, %v421
    %v423 = vsel %vm411, %v401, %v404
    %v424 = vsel %vm414, %v410, 1326507024
    %v425 = vsel %vm413, %v407, %v424
    %v426 = vsel %vm412, %v423, %v425
    %v427 = vshll.u32 %v387, 8
    %v428 = vmul.u32.u64.compose %v427, %v426
    %v429 = vextract.low.u32 %v428
    %v430 = vextract.high.u32 %v428
    %v431 = vmul.u32.u64.compose %v427, %v422
    %v432 = vextract.low.u32 %v431
    %v433 = vextract.high.u32 %v431
    %v434 = vmul.u32 %v427, %v418
    %v435 = vadd.s32 %v430, %v432
    %vm436 = vc.u32 %v430, %v432
    %v437 = vadd.s32 %v433, 1
    %v438 = vsel %vm436, %v437, %v433
    %v439 = vadd.s32 %v434, %v438
    %v440 = vadd.s32 %v439, 536870912
    %v441 = vshrl.u32 %v440, 30
    %v442 = vshll.u32 %v441, 30
    %v443 = vsub.s32 %v439, %v442
    %vm444 = vcmp.lt.s32.totalorder %v443, 0
    %v445 = vsub.s32 0, %v443
    %v446 = vsel %vm444, %v445, %v443
    %v447 = vclz %v446
    %v448 = vsub.s32 %v447, 2
    %vm449 = vcmp.gt.s32.totalorder 0, %v448
    %v450 = vsel %vm449, 0, %v448
    %v451 = vsub.s32 32, %v450
    %v452 = vshll.u32 %v443, %v450
    %v453 = vshrl.u32 %v435, %v451
    %v454 = vor.u32 %v452, %v453
    %v455 = vsub.s32 4294967266, %v450
    %v456 = vadd.s32 %v455, 127
    %v457 = vshll.u32 %v456, 23
    %v458 = vor.u32 4788187, %v457
    %v459 = vand.u32 2147483647, %v458
    %v461 = vcvt.s32.f32 %v454
    %v462 = vmul.f32 %v461, %v459
    %v463 = vxor.u32 %v462, 2147483648
    %v464 = vsel %vm381, %v463, %v462
    %v465 = vsub.s32 4, %v441
    %v466 = vsel %vm381, %v465, %v441
    %v467 = vsel %vm380, %v69, %v464
    %v468 = vsel %vm380, 0, %v466
    %v469 = vcosq.f32.pop %v467
    %v470 = vsinq.f32.pop %v467
    %vm471 = vweird.f32 %v69
    %v472 = vand.u32 %v468, 3
    %vm473 = vcmp.lt.s32.totalorder %v472, 2
    %vm474 = vcmp.eq.s32.totalorder %v472, 0
    %v475 = vxor.u32 %v470, 2147483648
    %v476 = vsel %vm474, %v469, %v475
    %vm477 = vcmp.eq.s32.totalorder %v472, 2
    %v478 = vxor.u32 %v469, 2147483648
    %v479 = vsel %vm477, %v478, %v470
    %v480 = vsel %vm473, %v476, %v479
    %v481 = vsel %vm471, nan, %v480
    %v482 = vmul.f32 %v62, %v172
    %v483 = vmul.f32 %v63, %v275
    %v484 = vmul.f32 %v64, %v378
    %v485 = vmul.f32 %v65, %v481
    %v486 = vand.u32 2147483647, %v66
    %vm487 = vcmp.le.f32.partialorder %v486, 0.7853982
    %vm488 = vcmp.lt.s32.totalorder %v66, 0
    %v489 = vand.u32 %v66, 2139095040
    %v490 = vshrl.u32 %v489, 23
    %v491 = vsub.s32 %v490, 127
    %v492 = vand.u32 2147483647, %v66
    %v493 = vand.u32 %v492, 8388607
    %v494 = vor.u32 %v493, 8388608
    %v495 = vsub.s32 0, %v494
    %v496 = vadd.s32 %v491, 1
    %vm497 = vcmp.gt.s32.totalorder %v496, 0
    %v498 = vsel %vm497, %v496, 0
    %v499 = vshrl.u32 %v498, 5
    %v500 = vand.u32 %v498, 31
    %v501 = vsub.s32 32, %v500
    %v502 = vshrl.u32 683565275, %v501
    %v503 = vshll.u32 683565275, %v500
    %v504 = vshrl.u32 2475754826, %v501
    %v505 = vor.u32 %v503, %v504
    %v506 = vshll.u32 2475754826, %v500
    %v507 = vshrl.u32 2131351028, %v501
    %v508 = vor.u32 %v506, %v507
    %v509 = vshll.u32 2131351028, %v500
    %v510 = vshrl.u32 2102212464, %v501
    %v511 = vor.u32 %v509, %v510
    %v512 = vshll.u32 2102212464, %v500
    %v513 = vshrl.u32 920167782, %v501
    %v514 = vor.u32 %v512, %v513
    %v515 = vshll.u32 920167782, %v500
    %v516 = vshrl.u32 1326507024, %v501
    %v517 = vor.u32 %v515, %v516
    %vm518 = vcmp.lt.s32.totalorder %v499, 1
    %vm519 = vcmp.lt.s32.totalorder %v499, 2
    %vm520 = vcmp.lt.s32.totalorder %v499, 3
    %vm521 = vcmp.lt.s32.totalorder %v499, 4
    %v522 = vsel %vm518, %v502, %v505
    %v523 = vsel %vm521, %v511, 2102212464
    %v524 = vsel %vm520, %v508, %v523
    %v525 = vsel %vm519, %v522, %v524
    %v526 = vsel %vm518, %v505, %v508
    %v527 = vsel %vm521, %v514, 920167782
    %v528 = vsel %vm520, %v511, %v527
    %v529 = vsel %vm519, %v526, %v528
    %v530 = vsel %vm518, %v508, %v511
    %v531 = vsel %vm521, %v517, 1326507024
    %v532 = vsel %vm520, %v514, %v531
    %v533 = vsel %vm519, %v530, %v532
    %v534 = vshll.u32 %v494, 8
    %v535 = vmul.u32.u64.compose %v534, %v533
    %v536 = vextract.low.u32 %v535
    %v537 = vextract.high.u32 %v535
    %v538 = vmul.u32.u64.compose %v534, %v529
    %v539 = vextract.low.u32 %v538
    %v540 = vextract.high.u32 %v538
    %v541 = vmul.u32 %v534, %v525
    %v542 = vadd.s32 %v537, %v539
    %vm543 = vc.u32 %v537, %v539
    %v544 = vadd.s32 %v540, 1
    %v545 = vsel %vm543, %v544, %v540
    %v546 = vadd.s32 %v541, %v545
    %v547 = vadd.s32 %v546, 536870912
    %v548 = vshrl.u32 %v547, 30
    %v549 = vshll.u32 %v548, 30
    %v550 = vsub.s32 %v546, %v549
    %vm551 = vcmp.lt.s32.totalorder %v550, 0
    %v552 = vsub.s32 0, %v550
    %v553 = vsel %vm551, %v552, %v550
    %v554 = vclz %v553
    %v555 = vsub.s32 %v554, 2
    %vm556 = vcmp.gt.s32.totalorder 0, %v555
    %v557 = vsel %vm556, 0, %v555
    %v558 = vsub.s32 32, %v557
    %v559 = vshll.u32 %v550, %v557
    %v560 = vshrl.u32 %v542, %v558
    %v561 = vor.u32 %v559, %v560
    %v562 = vsub.s32 4294967266, %v557
    %v563 = vadd.s32 %v562, 127
    %v564 = vshll.u32 %v563, 23
    %v565 = vor.u32 4788187, %v564
    %v566 = vand.u32 2147483647, %v565
    %v568 = vcvt.s32.f32 %v561
    %v569 = vmul.f32 %v568, %v566
    %v570 = vxor.u32 %v569, 2147483648
    %v571 = vsel %vm488, %v570, %v569
    %v572 = vsub.s32 4, %v548
    %v573 = vsel %vm488, %v572, %v548
    %v574 = vsel %vm487, %v66, %v571
    %v575 = vsel %vm487, 0, %v573
    %v576 = vcosq.f32.pop %v574
    %v577 = vsinq.f32.pop %v574
    %vm578 = vweird.f32 %v66
    %v579 = vadd.s32 %v575, 3
    %v580 = vand.u32 %v579, 3
    %vm581 = vcmp.lt.s32.totalorder %v580, 2
    %vm582 = vcmp.eq.s32.totalorder %v580, 0
    %v583 = vxor.u32 %v577, 2147483648
    %v584 = vsel %vm582, %v576, %v583
    %vm585 = vcmp.eq.s32.totalorder %v580, 2
    %v586 = vxor.u32 %v576, 2147483648
    %v587 = vsel %vm585, %v586, %v577
    %v588 = vsel %vm581, %v584, %v587
    %v589 = vsel %vm578, nan, %v588
    %v590 = vand.u32 2147483647, %v67
    %vm591 = vcmp.le.f32.partialorder %v590, 0.7853982
    %vm592 = vcmp.lt.s32.totalorder %v67, 0
    %v593 = vand.u32 %v67, 2139095040
    %v594 = vshrl.u32 %v593, 23
    %v595 = vsub.s32 %v594, 127
    %v596 = vand.u32 2147483647, %v67
    %v597 = vand.u32 %v596, 8388607
    %v598 = vor.u32 %v597, 8388608
    %v599 = vsub.s32 0, %v598
    %v600 = vadd.s32 %v595, 1
    %vm601 = vcmp.gt.s32.totalorder %v600, 0
    %v602 = vsel %vm601, %v600, 0
    %v603 = vshrl.u32 %v602, 5
    %v604 = vand.u32 %v602, 31
    %v605 = vsub.s32 32, %v604
    %v606 = vshrl.u32 683565275, %v605
    %v607 = vshll.u32 683565275, %v604
    %v608 = vshrl.u32 2475754826, %v605
    %v609 = vor.u32 %v607, %v608
    %v610 = vshll.u32 2475754826, %v604
    %v611 = vshrl.u32 2131351028, %v605
    %v612 = vor.u32 %v610, %v611
    %v613 = vshll.u32 2131351028, %v604
    %v614 = vshrl.u32 2102212464, %v605
    %v615 = vor.u32 %v613, %v614
    %v616 = vshll.u32 2102212464, %v604
    %v617 = vshrl.u32 920167782, %v605
    %v618 = vor.u32 %v616, %v617
    %v619 = vshll.u32 920167782, %v604
    %v620 = vshrl.u32 1326507024, %v605
    %v621 = vor.u32 %v619, %v620
    %vm622 = vcmp.lt.s32.totalorder %v603, 1
    %vm623 = vcmp.lt.s32.totalorder %v603, 2
    %vm624 = vcmp.lt.s32.totalorder %v603, 3
    %vm625 = vcmp.lt.s32.totalorder %v603, 4
    %v626 = vsel %vm622, %v606, %v609
    %v627 = vsel %vm625, %v615, 2102212464
    %v628 = vsel %vm624, %v612, %v627
    %v629 = vsel %vm623, %v626, %v628
    %v630 = vsel %vm622, %v609, %v612
    %v631 = vsel %vm625, %v618, 920167782
    %v632 = vsel %vm624, %v615, %v631
    %v633 = vsel %vm623, %v630, %v632
    %v634 = vsel %vm622, %v612, %v615
    %v635 = vsel %vm625, %v621, 1326507024
    %v636 = vsel %vm624, %v618, %v635
    %v637 = vsel %vm623, %v634, %v636
    %v638 = vshll.u32 %v598, 8
    %v639 = vmul.u32.u64.compose %v638, %v637
    %v640 = vextract.low.u32 %v639
    %v641 = vextract.high.u32 %v639
    %v642 = vmul.u32.u64.compose %v638, %v633
    %v643 = vextract.low.u32 %v642
    %v644 = vextract.high.u32 %v642
    %v645 = vmul.u32 %v638, %v629
    %v646 = vadd.s32 %v641, %v643
    %vm647 = vc.u32 %v641, %v643
    %v648 = vadd.s32 %v644, 1
    %v649 = vsel %vm647, %v648, %v644
    %v650 = vadd.s32 %v645, %v649
    %v651 = vadd.s32 %v650, 536870912
    %v652 = vshrl.u32 %v651, 30
    %v653 = vshll.u32 %v652, 30
    %v654 = vsub.s32 %v650, %v653
    %vm655 = vcmp.lt.s32.totalorder %v654, 0
    %v656 = vsub.s32 0, %v654
    %v657 = vsel %vm655, %v656, %v654
    %v658 = vclz %v657
    %v659 = vsub.s32 %v658, 2
    %vm660 = vcmp.gt.s32.totalorder 0, %v659
    %v661 = vsel %vm660, 0, %v659
    %v662 = vsub.s32 32, %v661
    %v663 = vshll.u32 %v654, %v661
    %v664 = vshrl.u32 %v646, %v662
    %v665 = vor.u32 %v663, %v664
    %v666 = vsub.s32 4294967266, %v661
    %v667 = vadd.s32 %v666, 127
    %v668 = vshll.u32 %v667, 23
    %v669 = vor.u32 4788187, %v668
    %v670 = vand.u32 2147483647, %v669
    %v672 = vcvt.s32.f32 %v665
    %v673 = vmul.f32 %v672, %v670
    %v674 = vxor.u32 %v673, 2147483648
    %v675 = vsel %vm592, %v674, %v673
    %v676 = vsub.s32 4, %v652
    %v677 = vsel %vm592, %v676, %v652
    %v678 = vsel %vm591, %v67, %v675
    %v679 = vsel %vm591, 0, %v677
    %v680 = vcosq.f32.pop %v678
    %v681 = vsinq.f32.pop %v678
    %vm682 = vweird.f32 %v67
    %v683 = vadd.s32 %v679, 3
    %v684 = vand.u32 %v683, 3
    %vm685 = vcmp.lt.s32.totalorder %v684, 2
    %vm686 = vcmp.eq.s32.totalorder %v684, 0
    %v687 = vxor.u32 %v681, 2147483648
    %v688 = vsel %vm686, %v680, %v687
    %vm689 = vcmp.eq.s32.totalorder %v684, 2
    %v690 = vxor.u32 %v680, 2147483648
    %v691 = vsel %vm689, %v690, %v681
    %v692 = vsel %vm685, %v688, %v691
    %v693 = vsel %vm682, nan, %v692
    %v694 = vand.u32 2147483647, %v68
    %vm695 = vcmp.le.f32.partialorder %v694, 0.7853982
    %vm696 = vcmp.lt.s32.totalorder %v68, 0
    %v697 = vand.u32 %v68, 2139095040
    %v698 = vshrl.u32 %v697, 23
    %v699 = vsub.s32 %v698, 127
    %v700 = vand.u32 2147483647, %v68
    %v701 = vand.u32 %v700, 8388607
    %v702 = vor.u32 %v701, 8388608
    %v703 = vsub.s32 0, %v702
    %v704 = vadd.s32 %v699, 1
    %vm705 = vcmp.gt.s32.totalorder %v704, 0
    %v706 = vsel %vm705, %v704, 0
    %v707 = vshrl.u32 %v706, 5
    %v708 = vand.u32 %v706, 31
    %v709 = vsub.s32 32, %v708
    %v710 = vshrl.u32 683565275, %v709
    %v711 = vshll.u32 683565275, %v708
    %v712 = vshrl.u32 2475754826, %v709
    %v713 = vor.u32 %v711, %v712
    %v714 = vshll.u32 2475754826, %v708
    %v715 = vshrl.u32 2131351028, %v709
    %v716 = vor.u32 %v714, %v715
    %v717 = vshll.u32 2131351028, %v708
    %v718 = vshrl.u32 2102212464, %v709
    %v719 = vor.u32 %v717, %v718
    %v720 = vshll.u32 2102212464, %v708
    %v721 = vshrl.u32 920167782, %v709
    %v722 = vor.u32 %v720, %v721
    %v723 = vshll.u32 920167782, %v708
    %v724 = vshrl.u32 1326507024, %v709
    %v725 = vor.u32 %v723, %v724
    %vm726 = vcmp.lt.s32.totalorder %v707, 1
    %vm727 = vcmp.lt.s32.totalorder %v707, 2
    %vm728 = vcmp.lt.s32.totalorder %v707, 3
    %vm729 = vcmp.lt.s32.totalorder %v707, 4
    %v730 = vsel %vm726, %v710, %v713
    %v731 = vsel %vm729, %v719, 2102212464
    %v732 = vsel %vm728, %v716, %v731
    %v733 = vsel %vm727, %v730, %v732
    %v734 = vsel %vm726, %v713, %v716
    %v735 = vsel %vm729, %v722, 920167782
    %v736 = vsel %vm728, %v719, %v735
    %v737 = vsel %vm727, %v734, %v736
    %v738 = vsel %vm726, %v716, %v719
    %v739 = vsel %vm729, %v725, 1326507024
    %v740 = vsel %vm728, %v722, %v739
    %v741 = vsel %vm727, %v738, %v740
    %v742 = vshll.u32 %v702, 8
    %v743 = vmul.u32.u64.compose %v742, %v741
    %v744 = vextract.low.u32 %v743
    %v745 = vextract.high.u32 %v743
    %v746 = vmul.u32.u64.compose %v742, %v737
    %v747 = vextract.low.u32 %v746
    %v748 = vextract.high.u32 %v746
    %v749 = vmul.u32 %v742, %v733
    %v750 = vadd.s32 %v745, %v747
    %vm751 = vc.u32 %v745, %v747
    %v752 = vadd.s32 %v748, 1
    %v753 = vsel %vm751, %v752, %v748
    %v754 = vadd.s32 %v749, %v753
    %v755 = vadd.s32 %v754, 536870912
    %v756 = vshrl.u32 %v755, 30
    %v757 = vshll.u32 %v756, 30
    %v758 = vsub.s32 %v754, %v757
    %vm759 = vcmp.lt.s32.totalorder %v758, 0
    %v760 = vsub.s32 0, %v758
    %v761 = vsel %vm759, %v760, %v758
    %v762 = vclz %v761
    %v763 = vsub.s32 %v762, 2
    %vm764 = vcmp.gt.s32.totalorder 0, %v763
    %v765 = vsel %vm764, 0, %v763
    %v766 = vsub.s32 32, %v765
    %v767 = vshll.u32 %v758, %v765
    %v768 = vshrl.u32 %v750, %v766
    %v769 = vor.u32 %v767, %v768
    %v770 = vsub.s32 4294967266, %v765
    %v771 = vadd.s32 %v770, 127
    %v772 = vshll.u32 %v771, 23
    %v773 = vor.u32 4788187, %v772
    %v774 = vand.u32 2147483647, %v773
    %v776 = vcvt.s32.f32 %v769
    %v777 = vmul.f32 %v776, %v774
    %v778 = vxor.u32 %v777, 2147483648
    %v779 = vsel %vm696, %v778, %v777
    %v780 = vsub.s32 4, %v756
    %v781 = vsel %vm696, %v780, %v756
    %v782 = vsel %vm695, %v68, %v779
    %v783 = vsel %vm695, 0, %v781
    %v784 = vcosq.f32.pop %v782
    %v785 = vsinq.f32.pop %v782
    %vm786 = vweird.f32 %v68
    %v787 = vadd.s32 %v783, 3
    %v788 = vand.u32 %v787, 3
    %vm789 = vcmp.lt.s32.totalorder %v788, 2
    %vm790 = vcmp.eq.s32.totalorder %v788, 0
    %v791 = vxor.u32 %v785, 2147483648
    %v792 = vsel %vm790, %v784, %v791
    %vm793 = vcmp.eq.s32.totalorder %v788, 2
    %v794 = vxor.u32 %v784, 2147483648
    %v795 = vsel %vm793, %v794, %v785
    %v796 = vsel %vm789, %v792, %v795
    %v797 = vsel %vm786, nan, %v796
    %v798 = vand.u32 2147483647, %v69
    %vm799 = vcmp.le.f32.partialorder %v798, 0.7853982
    %vm800 = vcmp.lt.s32.totalorder %v69, 0
    %v801 = vand.u32 %v69, 2139095040
    %v802 = vshrl.u32 %v801, 23
    %v803 = vsub.s32 %v802, 127
    %v804 = vand.u32 2147483647, %v69
    %v805 = vand.u32 %v804, 8388607
    %v806 = vor.u32 %v805, 8388608
    %v807 = vsub.s32 0, %v806
    %v808 = vadd.s32 %v803, 1
    %vm809 = vcmp.gt.s32.totalorder %v808, 0
    %v810 = vsel %vm809, %v808, 0
    %v811 = vshrl.u32 %v810, 5
    %v812 = vand.u32 %v810, 31
    %v813 = vsub.s32 32, %v812
    %v814 = vshrl.u32 683565275, %v813
    %v815 = vshll.u32 683565275, %v812
    %v816 = vshrl.u32 2475754826, %v813
    %v817 = vor.u32 %v815, %v816
    %v818 = vshll.u32 2475754826, %v812
    %v819 = vshrl.u32 2131351028, %v813
    %v820 = vor.u32 %v818, %v819
    %v821 = vshll.u32 2131351028, %v812
    %v822 = vshrl.u32 2102212464, %v813
    %v823 = vor.u32 %v821, %v822
    %v824 = vshll.u32 2102212464, %v812
    %v825 = vshrl.u32 920167782, %v813
    %v826 = vor.u32 %v824, %v825
    %v827 = vshll.u32 920167782, %v812
    %v828 = vshrl.u32 1326507024, %v813
    %v829 = vor.u32 %v827, %v828
    %vm830 = vcmp.lt.s32.totalorder %v811, 1
    %vm831 = vcmp.lt.s32.totalorder %v811, 2
    %vm832 = vcmp.lt.s32.totalorder %v811, 3
    %vm833 = vcmp.lt.s32.totalorder %v811, 4
    %v834 = vsel %vm830, %v814, %v817
    %v835 = vsel %vm833, %v823, 2102212464
    %v836 = vsel %vm832, %v820, %v835
    %v837 = vsel %vm831, %v834, %v836
    %v838 = vsel %vm830, %v817, %v820
    %v839 = vsel %vm833, %v826, 920167782
    %v840 = vsel %vm832, %v823, %v839
    %v841 = vsel %vm831, %v838, %v840
    %v842 = vsel %vm830, %v820, %v823
    %v843 = vsel %vm833, %v829, 1326507024
    %v844 = vsel %vm832, %v826, %v843
    %v845 = vsel %vm831, %v842, %v844
    %v846 = vshll.u32 %v806, 8
    %v847 = vmul.u32.u64.compose %v846, %v845
    %v848 = vextract.low.u32 %v847
    %v849 = vextract.high.u32 %v847
    %v850 = vmul.u32.u64.compose %v846, %v841
    %v851 = vextract.low.u32 %v850
    %v852 = vextract.high.u32 %v850
    %v853 = vmul.u32 %v846, %v837
    %v854 = vadd.s32 %v849, %v851
    %vm855 = vc.u32 %v849, %v851
    %v856 = vadd.s32 %v852, 1
    %v857 = vsel %vm855, %v856, %v852
    %v858 = vadd.s32 %v853, %v857
    %v859 = vadd.s32 %v858, 536870912
    %v860 = vshrl.u32 %v859, 30
    %v861 = vshll.u32 %v860, 30
    %v862 = vsub.s32 %v858, %v861
    %vm863 = vcmp.lt.s32.totalorder %v862, 0
    %v864 = vsub.s32 0, %v862
    %v865 = vsel %vm863, %v864, %v862
    %v866 = vclz %v865
    %v867 = vsub.s32 %v866, 2
    %vm868 = vcmp.gt.s32.totalorder 0, %v867
    %v869 = vsel %vm868, 0, %v867
    %v870 = vsub.s32 32, %v869
    %v871 = vshll.u32 %v862, %v869
    %v872 = vshrl.u32 %v854, %v870
    %v873 = vor.u32 %v871, %v872
    %v874 = vsub.s32 4294967266, %v869
    %v875 = vadd.s32 %v874, 127
    %v876 = vshll.u32 %v875, 23
    %v877 = vor.u32 4788187, %v876
    %v878 = vand.u32 2147483647, %v877
    %v880 = vcvt.s32.f32 %v873
    %v881 = vmul.f32 %v880, %v878
    %v882 = vxor.u32 %v881, 2147483648
    %v883 = vsel %vm800, %v882, %v881
    %v884 = vsub.s32 4, %v860
    %v885 = vsel %vm800, %v884, %v860
    %v886 = vsel %vm799, %v69, %v883
    %v887 = vsel %vm799, 0, %v885
    %v888 = vcosq.f32.pop %v886
    %v889 = vsinq.f32.pop %v886
    %vm890 = vweird.f32 %v69
    %v891 = vadd.s32 %v887, 3
    %v892 = vand.u32 %v891, 3
    %vm893 = vcmp.lt.s32.totalorder %v892, 2
    %vm894 = vcmp.eq.s32.totalorder %v892, 0
    %v895 = vxor.u32 %v889, 2147483648
    %v896 = vsel %vm894, %v888, %v895
    %vm897 = vcmp.eq.s32.totalorder %v892, 2
    %v898 = vxor.u32 %v888, 2147483648
    %v899 = vsel %vm897, %v898, %v889
    %v900 = vsel %vm893, %v896, %v899
    %v901 = vsel %vm890, nan, %v900
    %v902 = vmul.f32 %v62, %v589
    %v903 = vmul.f32 %v63, %v693
    %v904 = vmul.f32 %v64, %v797
    %v905 = vmul.f32 %v65, %v901
    %v906 = vpack.c.bf16 %v483, %v482
    %v907 = vpack.c.bf16 %v485, %v484
    %v908 = vpack.c.bf16 %v903, %v902
    %v909 = vpack.c.bf16 %v905, %v904
    %v910 = vld [vmem:[#allocation4] sm:$0xff]
    %v911 = vld [vmem:[#allocation4 + $0x8] sm:$0xff]
    %v912 = vld [vmem:[#allocation4 + $0x10] sm:$0xff]
    %v913 = vld [vmem:[#allocation4 + $0x18] sm:$0xff]
    %v914 = vld [vmem:[#allocation4 + $0x20] sm:$0xff]
    %v915 = vld [vmem:[#allocation4 + $0x28] sm:$0xff]
    %v916 = vld [vmem:[#allocation4 + $0x30] sm:$0xff]
    %v917 = vld [vmem:[#allocation4 + $0x38] sm:$0xff]
    %v918 = vld [vmem:[#allocation4 + $0x40] sm:$0xff]
    %v919 = vld [vmem:[#allocation4 + $0x48] sm:$0xff]
    %v920 = vld [vmem:[#allocation4 + $0x50] sm:$0xff]
    %v921 = vld [vmem:[#allocation4 + $0x58] sm:$0xff]
    %v922 = vld [vmem:[#allocation4 + $0x60] sm:$0xff]
    %v923 = vld [vmem:[#allocation4 + $0x68] sm:$0xff]
    %v924 = vld [vmem:[#allocation4 + $0x70] sm:$0xff]
    %v925 = vld [vmem:[#allocation4 + $0x78] sm:$0xff]
    %v926 = vld [vmem:[#allocation4 + $0x80] sm:$0xff]
    %v927 = vld [vmem:[#allocation4 + $0x88] sm:$0xff]
    %v928 = vld [vmem:[#allocation4 + $0x90] sm:$0xff]
    %v929 = vld [vmem:[#allocation4 + $0x98] sm:$0xff]
    %v930 = vld [vmem:[#allocation4 + $0xa0] sm:$0xff]
    %v931 = vld [vmem:[#allocation4 + $0xa8] sm:$0xff]
    %v932 = vld [vmem:[#allocation4 + $0xb0] sm:$0xff]
    %v933 = vld [vmem:[#allocation4 + $0xb8] sm:$0xff]
    %v934 = vld [vmem:[#allocation4 + $0xc0] sm:$0xff]
    %v935 = vld [vmem:[#allocation4 + $0xc8] sm:$0xff]
    %v936 = vld [vmem:[#allocation4 + $0xd0] sm:$0xff]
    %v937 = vld [vmem:[#allocation4 + $0xd8] sm:$0xff]
    %v938 = vld [vmem:[#allocation4 + $0xe0] sm:$0xff]
    %v939 = vld [vmem:[#allocation4 + $0xe8] sm:$0xff]
    %v940 = vld [vmem:[#allocation4 + $0xf0] sm:$0xff]
    %v941 = vld [vmem:[#allocation4 + $0xf8] sm:$0xff]
    %v942 = vld [vmem:[%s2] sm:$0xff]
    %v943 = vld [vmem:[%s2 + $0x8] sm:$0xff]
    %v944 = vld [vmem:[%s2 + $0x10] sm:$0xff]
    %v945 = vld [vmem:[%s2 + $0x18] sm:$0xff]
    %v946 = vld [vmem:[#allocation6] sm:$0x3]
    %948 = vset.pattern.permute.xlu0 0
    %949 = vperm.xlu0 %948, %v942
    %v950 = vpop.permute.xlu0 %949
    %953 = vset.pattern.permute.xlu0 0
    %954 = vperm.xlu0 %953, %v943
    %v955 = vpop.permute.xlu0 %954
    %958 = vset.pattern.permute.xlu0 0
    %959 = vperm.xlu0 %958, %v944
    %v960 = vpop.permute.xlu0 %959
    %963 = vset.pattern.permute.xlu0 0
    %964 = vperm.xlu0 %963, %v945
    %v965 = vpop.permute.xlu0 %964
    %v968 = vlaneseq
    %v969 = vshrl.u32 %v968, 7
    %v970 = vsub.s32 0, %v969
    %v971 = vrot.slane %v946, %v970
    %v972 = vlaneseq
    %v973 = vshrl.u32 %v972, 7
    %v974 = vsub.s32 1, %v973
    %v975 = vrot.slane %v946, %v974
    %v978 = vmul.f32 %v950, %v971
    %v979 = vmul.f32 %v950, %v975
    %v980 = vmul.f32 %v955, %v971
    %v981 = vmul.f32 %v955, %v975
    %v982 = vmul.f32 %v960, %v971
    %v983 = vmul.f32 %v960, %v975
    %v984 = vmul.f32 %v965, %v971
    %v985 = vmul.f32 %v965, %v975
    %v1018 = vunpack.c.l.b16 %v910
    %v1019 = vunpack.c.h.b16 %v910
    %v1020 = vunpack.c.l.b16 %v911
    %v1021 = vunpack.c.h.b16 %v911
    %v1022 = vunpack.c.l.b16 %v912
    %v1023 = vunpack.c.h.b16 %v912
    %v1024 = vunpack.c.l.b16 %v913
    %v1025 = vunpack.c.h.b16 %v913
    %v1026 = vunpack.c.l.b16 %v914
    %v1027 = vunpack.c.h.b16 %v914
    %v1028 = vunpack.c.l.b16 %v915
    %v1029 = vunpack.c.h.b16 %v915
    %v1030 = vunpack.c.l.b16 %v916
    %v1031 = vunpack.c.h.b16 %v916
    %v1032 = vunpack.c.l.b16 %v917
    %v1033 = vunpack.c.h.b16 %v917
    %v1034 = vunpack.c.l.b16 %v918
    %v1035 = vunpack.c.h.b16 %v918
    %v1036 = vunpack.c.l.b16 %v919
    %v1037 = vunpack.c.h.b16 %v919
    %v1038 = vunpack.c.l.b16 %v920
    %v1039 = vunpack.c.h.b16 %v920
    %v1040 = vunpack.c.l.b16 %v921
    %v1041 = vunpack.c.h.b16 %v921
    %v1042 = vunpack.c.l.b16 %v922
    %v1043 = vunpack.c.h.b16 %v922
    %v1044 = vunpack.c.l.b16 %v923
    %v1045 = vunpack.c.h.b16 %v923
    %v1046 = vunpack.c.l.b16 %v924
    %v1047 = vunpack.c.h.b16 %v924
    %v1048 = vunpack.c.l.b16 %v925
    %v1049 = vunpack.c.h.b16 %v925
    %v1050 = vunpack.c.l.b16 %v926
    %v1051 = vunpack.c.h.b16 %v926
    %v1052 = vunpack.c.l.b16 %v927
    %v1053 = vunpack.c.h.b16 %v927
    %v1054 = vunpack.c.l.b16 %v928
    %v1055 = vunpack.c.h.b16 %v928
    %v1056 = vunpack.c.l.b16 %v929
    %v1057 = vunpack.c.h.b16 %v929
    %v1058 = vunpack.c.l.b16 %v930
    %v1059 = vunpack.c.h.b16 %v930
    %v1060 = vunpack.c.l.b16 %v931
    %v1061 = vunpack.c.h.b16 %v931
    %v1062 = vunpack.c.l.b16 %v932
    %v1063 = vunpack.c.h.b16 %v932
    %v1064 = vunpack.c.l.b16 %v933
    %v1065 = vunpack.c.h.b16 %v933
    %v1066 = vunpack.c.l.b16 %v934
    %v1067 = vunpack.c.h.b16 %v934
    %v1068 = vunpack.c.l.b16 %v935
    %v1069 = vunpack.c.h.b16 %v935
    %v1070 = vunpack.c.l.b16 %v936
    %v1071 = vunpack.c.h.b16 %v936
    %v1072 = vunpack.c.l.b16 %v937
    %v1073 = vunpack.c.h.b16 %v937
    %v1074 = vunpack.c.l.b16 %v938
    %v1075 = vunpack.c.h.b16 %v938
    %v1076 = vunpack.c.l.b16 %v939
    %v1077 = vunpack.c.h.b16 %v939
    %v1078 = vunpack.c.l.b16 %v940
    %v1079 = vunpack.c.h.b16 %v940
    %v1080 = vunpack.c.l.b16 %v941
    %v1081 = vunpack.c.h.b16 %v941
    %v1082 = vpack.c.b16 %v1020, %v1018
    %v1083 = vpack.c.b16 %v1021, %v1019
    %v1084 = vpack.c.b16 %v1024, %v1022
    %v1085 = vpack.c.b16 %v1025, %v1023
    %v1086 = vpack.c.b16 %v1028, %v1026
    %v1087 = vpack.c.b16 %v1029, %v1027
    %v1088 = vpack.c.b16 %v1032, %v1030
    %v1089 = vpack.c.b16 %v1033, %v1031
    %v1090 = vpack.c.b16 %v1036, %v1034
    %v1091 = vpack.c.b16 %v1037, %v1035
    %v1092 = vpack.c.b16 %v1040, %v1038
    %v1093 = vpack.c.b16 %v1041, %v1039
    %v1094 = vpack.c.b16 %v1044, %v1042
    %v1095 = vpack.c.b16 %v1045, %v1043
    %v1096 = vpack.c.b16 %v1048, %v1046
    %v1097 = vpack.c.b16 %v1049, %v1047
    %v1098 = vpack.c.b16 %v1052, %v1050
    %v1099 = vpack.c.b16 %v1053, %v1051
    %v1100 = vpack.c.b16 %v1056, %v1054
    %v1101 = vpack.c.b16 %v1057, %v1055
    %v1102 = vpack.c.b16 %v1060, %v1058
    %v1103 = vpack.c.b16 %v1061, %v1059
    %v1104 = vpack.c.b16 %v1064, %v1062
    %v1105 = vpack.c.b16 %v1065, %v1063
    %v1106 = vpack.c.b16 %v1068, %v1066
    %v1107 = vpack.c.b16 %v1069, %v1067
    %v1108 = vpack.c.b16 %v1072, %v1070
    %v1109 = vpack.c.b16 %v1073, %v1071
    %v1110 = vpack.c.b16 %v1076, %v1074
    %v1111 = vpack.c.b16 %v1077, %v1075
    %v1112 = vpack.c.b16 %v1080, %v1078
    %v1113 = vpack.c.b16 %v1081, %v1079
    %1146 = vmatprep.subr.bf16.mxu0 %v1083
    %1147 = vmatpush1.bf16.msra.mxu0 %v1082
    %1148 = vmatprep.subr.bf16.mxu0 %v1085
    %1149 = vmatpush1.bf16.msra.mxu0 %v1084
    %1150 = vmatprep.subr.bf16.mxu0 %v1087
    %1151 = vmatpush1.bf16.msra.mxu0 %v1086
    %1152 = vmatprep.subr.bf16.mxu0 %v1089
    %1153 = vmatpush1.bf16.msra.mxu0 %v1088
    %1154 = vmatprep.subr.bf16.mxu0 %v1091
    %1155 = vmatpush1.bf16.msra.mxu0 %v1090
    %1156 = vmatprep.subr.bf16.mxu0 %v1093
    %1157 = vmatpush1.bf16.msra.mxu0 %v1092
    %1158 = vmatprep.subr.bf16.mxu0 %v1095
    %1159 = vmatpush1.bf16.msra.mxu0 %v1094
    %1160 = vmatprep.subr.bf16.mxu0 %v1097
    %1161 = vmatpush1.bf16.msra.mxu0 %v1096
    %1162 = vmatprep.subr.bf16.mxu0 %v1099
    %1163 = vmatpush1.bf16.msra.mxu0 %v1098
    %1164 = vmatprep.subr.bf16.mxu0 %v1101
    %1165 = vmatpush1.bf16.msra.mxu0 %v1100
    %1166 = vmatprep.subr.bf16.mxu0 %v1103
    %1167 = vmatpush1.bf16.msra.mxu0 %v1102
    %1168 = vmatprep.subr.bf16.mxu0 %v1105
    %1169 = vmatpush1.bf16.msra.mxu0 %v1104
    %1170 = vmatprep.subr.bf16.mxu0 %v1107
    %1171 = vmatpush1.bf16.msra.mxu0 %v1106
    %1172 = vmatprep.subr.bf16.mxu0 %v1109
    %1173 = vmatpush1.bf16.msra.mxu0 %v1108
    %1174 = vmatprep.subr.bf16.mxu0 %v1111
    %1175 = vmatpush1.bf16.msra.mxu0 %v1110
    %1176 = vmatprep.subr.bf16.mxu0 %v1113
    %1177 = vmatpush1.bf16.msra.mxu0 %v1112
    %1178 = vmatprep.mubr.bf16.mxu0 %v908
    %1179 = vmatmul.mubr.bf16.gmra.mrb[0].mxu0 %v906
    %v1180 = vpop.f32.mrb[0].mxu0
    %v1181 = vadd.f32 %v978, %v1180
    %v1182 = vpop.f32.mrb[0].mxu0
    %v1183 = vadd.f32 %v979, %v1182
    %v1184 = vpop.f32.mrb[0].mxu0
    %v1185 = vadd.f32 %v980, %v1184
    %v1186 = vpop.f32.mrb[0].mxu0
    %v1187 = vadd.f32 %v981, %v1186
    %1188 = vmatprep.mubr.bf16.mxu0 %v909
    %1189 = vmatmul.mubr.bf16.gmra.mrb[0].mxu0 %v907
    %v1190 = vpop.f32.mrb[0].mxu0
    %v1191 = vadd.f32 %v982, %v1190
    %v1192 = vpop.f32.mrb[0].mxu0
    %v1193 = vadd.f32 %v983, %v1192
    %v1194 = vpop.f32.mrb[0].mxu0
    %v1195 = vadd.f32 %v984, %v1194
    %v1196 = vpop.f32.mrb[0].mxu0
    %v1197 = vadd.f32 %v985, %v1196
    %1198 = vdwg.mxu0
    %v1203 = vrot.slane %v1181, 7
    %v1204 = vrot.slane %v1185, 7
    %v1205 = vrot.slane %v1191, 7
    %v1206 = vrot.slane %v1195, 7
    %1207 = vrot.lane.b32.xlu0 %v1203, 64
    %v1208 = vpop.permute.xlu0 %1207
    %1209 = vrot.lane.b32.xlu0 %v1204, 64
    %v1210 = vpop.permute.xlu0 %1209
    %1211 = vrot.lane.b32.xlu0 %v1205, 64
    %v1212 = vpop.permute.xlu0 %1211
    %1213 = vrot.lane.b32.xlu0 %v1206, 64
    %v1214 = vpop.permute.xlu0 %1213
    %v1219 = vadd.f32 %v1181, %v1208
    %v1220 = vadd.f32 %v1185, %v1210
    %v1221 = vadd.f32 %v1191, %v1212
    %v1222 = vadd.f32 %v1195, %v1214
    %v1227 = vrot.slane %v1183, 6
    %v1228 = vrot.slane %v1187, 6
    %v1229 = vrot.slane %v1193, 6
    %v1230 = vrot.slane %v1197, 6
    %v1235 = vadd.f32 %v1219, %v1227
    %v1236 = vadd.f32 %v1220, %v1228
    %v1237 = vadd.f32 %v1221, %v1229
    %v1238 = vadd.f32 %v1222, %v1230
    %v1239 = vrot.slane %v1183, 5
    %v1240 = vrot.slane %v1187, 5
    %v1241 = vrot.slane %v1193, 5
    %v1242 = vrot.slane %v1197, 5
    %1243 = vrot.lane.b32.xlu0 %v1239, 64
    %v1244 = vpop.permute.xlu0 %1243
    %1245 = vrot.lane.b32.xlu0 %v1240, 64
    %v1246 = vpop.permute.xlu0 %1245
    %1247 = vrot.lane.b32.xlu0 %v1241, 64
    %v1248 = vpop.permute.xlu0 %1247
    %1249 = vrot.lane.b32.xlu0 %v1242, 64
    %v1250 = vpop.permute.xlu0 %1249
    %v1255 = vadd.f32 %v1235, %v1244
    %v1256 = vadd.f32 %v1236, %v1246
    %v1257 = vadd.f32 %v1237, %v1248
    %v1258 = vadd.f32 %v1238, %v1250
    %v1259 = vrot.slane %v1183, 7
    %v1260 = vrot.slane %v1187, 7
    %v1261 = vrot.slane %v1193, 7
    %v1262 = vrot.slane %v1197, 7
    %1263 = vrot.lane.b32.xlu0 %v1259, 64
    %v1264 = vpop.permute.xlu0 %1263
    %1265 = vrot.lane.b32.xlu0 %v1260, 64
    %v1266 = vpop.permute.xlu0 %1265
    %1267 = vrot.lane.b32.xlu0 %v1261, 64
    %v1268 = vpop.permute.xlu0 %1267
    %1269 = vrot.lane.b32.xlu0 %v1262, 64
    %v1270 = vpop.permute.xlu0 %1269
    %v1275 = vadd.f32 %v1181, %v1264
    %v1276 = vadd.f32 %v1185, %v1266
    %v1277 = vadd.f32 %v1191, %v1268
    %v1278 = vadd.f32 %v1195, %v1270
    %v1279 = vadd.f32 %v1275, %v1227
    %v1280 = vadd.f32 %v1276, %v1228
    %v1281 = vadd.f32 %v1277, %v1229
    %v1282 = vadd.f32 %v1278, %v1230
    %v1283 = vadd.f32 %v1183, %v1264
    %v1284 = vadd.f32 %v1187, %v1266
    %v1285 = vadd.f32 %v1193, %v1268
    %v1286 = vadd.f32 %v1197, %v1270
    %v1291 = vrot.slane %v1279, 7
    %v1292 = vrot.slane %v1280, 7
    %v1293 = vrot.slane %v1281, 7
    %v1294 = vrot.slane %v1282, 7
    %1295 = vrot.lane.b32.xlu0 %v1291, 64
    %v1296 = vpop.permute.xlu0 %1295
    %1297 = vrot.lane.b32.xlu0 %v1292, 64
    %v1298 = vpop.permute.xlu0 %1297
    %1299 = vrot.lane.b32.xlu0 %v1293, 64
    %v1300 = vpop.permute.xlu0 %1299
    %1301 = vrot.lane.b32.xlu0 %v1294, 64
    %v1302 = vpop.permute.xlu0 %1301
    %v1311 = vrot.slane %v1283, 6
    %v1312 = vrot.slane %v1284, 6
    %v1313 = vrot.slane %v1285, 6
    %v1314 = vrot.slane %v1286, 6
    %vm1319 = vcmask 1040384
    %v1320 = vsel %vm1319, %v1181, %v1219
    %v1321 = vsel %vm1319, %v1185, %v1220
    %v1322 = vsel %vm1319, %v1191, %v1221
    %v1323 = vsel %vm1319, %v1195, %v1222
    %vm1324 = vcmask 1041408
    %v1325 = vsel %vm1324, %v1320, %v1235
    %v1326 = vsel %vm1324, %v1321, %v1236
    %v1327 = vsel %vm1324, %v1322, %v1237
    %v1328 = vsel %vm1324, %v1323, %v1238
    %vm1329 = vcmask 1042432
    %v1330 = vsel %vm1329, %v1325, %v1255
    %v1331 = vsel %vm1329, %v1326, %v1256
    %v1332 = vsel %vm1329, %v1327, %v1257
    %v1333 = vsel %vm1329, %v1328, %v1258
    %v1334 = vsel %vm1319, %v1296, %v1311
    %v1335 = vsel %vm1319, %v1298, %v1312
    %v1336 = vsel %vm1319, %v1300, %v1313
    %v1337 = vsel %vm1319, %v1302, %v1314
    %v1338 = vsel %vm1324, %v1334, %v1244
    %v1339 = vsel %vm1324, %v1335, %v1246
    %v1340 = vsel %vm1324, %v1336, %v1248
    %v1341 = vsel %vm1324, %v1337, %v1250
    %v1342 = vld [vmem:[%s5] sm:$0xff]
    %v1343 = vld [vmem:[%s5 + $0x8] sm:$0x7]
    %v1344 = vmul.f32 %v1330, %v1342
    %v1345 = vmul.f32 %v1338, %v1343
    %v1346 = vmul.f32 %v1331, %v1342
    %v1347 = vmul.f32 %v1339, %v1343
    %v1348 = vmul.f32 %v1332, %v1342
    %v1349 = vmul.f32 %v1340, %v1343
    %v1350 = vmul.f32 %v1333, %v1342
    %v1351 = vmul.f32 %v1341, %v1343
    %vm1352 = vcmask 523264
    %1353 = vst.msk [vmem:[%s6] sm:$0xff] %vm1352, %v1344
    %vm1354 = vcmask 518144
    %1355 = vst.msk [vmem:[%s6 + $0x8] sm:$0x7] %vm1354, %v1345
    %1356 = vst.msk [vmem:[%s6 + $0x10] sm:$0xff] %vm1352, %v1346
    %1357 = vst.msk [vmem:[%s6 + $0x18] sm:$0x7] %vm1354, %v1347
    %1358 = vst.msk [vmem:[%s6 + $0x20] sm:$0xff] %vm1352, %v1348
    %1359 = vst.msk [vmem:[%s6 + $0x28] sm:$0x7] %vm1354, %v1349
    %1360 = vst.msk [vmem:[%s6 + $0x30] sm:$0xff] %vm1352, %v1350
    %1361 = vst.msk [vmem:[%s6 + $0x38] sm:$0x7] %vm1354, %v1351
    // Predicated region
    $region38: #{tpu_custom_call.1} parent=1 // pred_check
      _
    $region39: #{tpu_custom_call.1} parent=1 // pred_check_branch
      %1363 = sbr.rel (0) target = $region41
    $region40: #{tpu_custom_call.1} parent=1 // pred_region
      _
    $region41: #{tpu_custom_call.1} parent=1 // pred_fallthru
      _
    // Predicated region
    $region42: #{tpu_custom_call.1} parent=1 // pred_check
      _
    $region43: #{tpu_custom_call.1} parent=1 // pred_check_branch
      %1365 = sbr.rel (0) target = $region45
    $region44: #{tpu_custom_call.1} parent=1 // pred_region
      _
    $region45: #{tpu_custom_call.1} parent=1 // pred_fallthru
      _
    %1366 = vsyncpa [#allocation3], 1
    %1367 = vsyncpa [#allocation5], 1

</llo_original>
